<compile_context>
chip_gen: v5e
topology: v5e:2x2
jax: 0.10.0
libtpu: 0.0.40
codegen_flags: <defaults>
</compile_context>

<pallas_src>
import math

import jax
import jax.numpy as jnp
from jax.experimental import pallas as pl
from jax.experimental.pallas import tpu as pltpu


# ----------------------------------------------------------------------------
# Kernels
# ----------------------------------------------------------------------------

def _batched_kernel(scale_ref, a_ref, b_ref, out_ref):
    """Whole per-group matmul per grid step, Gb groups batched.

    a_ref: (Gb, M, K), b_ref: (Gb, K, N), out_ref: (Gb, M, N);
    scale_ref: (1,) f32 in SMEM (sA * sB).
    """
    acc = jnp.einsum("gmk,gkn->gmn", a_ref[...], b_ref[...],
                     preferred_element_type=jnp.float32)
    out_ref[...] = (acc * scale_ref[0]).astype(out_ref.dtype)


def _tiled_kernel_f32_out(scale_ref, a_ref, b_ref, out_ref):
    """K-reduction tile step; f32 output accumulated directly in out_ref."""
    k = pl.program_id(3)

    @pl.when(k == 0)
    def _init():
        out_ref[...] = jnp.zeros_like(out_ref)

    out_ref[...] += jnp.dot(a_ref[...], b_ref[...],
                            preferred_element_type=jnp.float32)

    @pl.when(k == pl.num_programs(3) - 1)
    def _finish():
        out_ref[...] *= scale_ref[0]


def _tiled_kernel(scale_ref, a_ref, b_ref, out_ref, acc_ref):
    """K-reduction tile step with f32 scratch accumulator (narrow output)."""
    k = pl.program_id(3)

    @pl.when(k == 0)
    def _init():
        acc_ref[...] = jnp.zeros_like(acc_ref)

    acc_ref[...] += jnp.dot(a_ref[...], b_ref[...],
                            preferred_element_type=jnp.float32)

    @pl.when(k == pl.num_programs(3) - 1)
    def _finish():
        out_ref[...] = (acc_ref[...] * scale_ref[0]).astype(out_ref.dtype)


# ----------------------------------------------------------------------------
# Wrapper helpers
# ----------------------------------------------------------------------------

def _round_up(x, m):
    return ((x + m - 1) // m) * m


def _pad_to(x, shape):
    pads = [(0, t - s) for s, t in zip(x.shape, shape)]
    if any(hi for _, hi in pads):
        x = jnp.pad(x, pads)
    return x


def _vmem_budget_bytes():
    """Generation-aware VMEM budget: physical capacity minus headroom."""
    phys = 64 << 20                       # conservative default (v7x per-TC)
    try:
        info = pltpu.get_tpu_info()
        phys = int(getattr(info, "vmem_capacity_bytes", phys) or phys)
    except Exception:
        pass
    return max(32 << 20, phys - (8 << 20))


def _choose_tiles(G, M, K, N, op_itemsize, out_itemsize):
    """512-class MXU tiles for large dims; byte-budgeted group batching when
    the whole per-group matmul fits in a single grid step."""
    tm = M if M <= 512 else 512
    tn = N if N <= 512 else 512
    tk = K if K <= 512 else 512
    Gb = 1
    if tm == M and tn == N and tk == K:
        per_group = (M * K + K * N) * op_itemsize + M * N * out_itemsize
        Gb = max(1, min(G, (8 << 20) // max(per_group, 1)))   # ~8 MiB / step
    return Gb, tm, tk, tn


# ----------------------------------------------------------------------------
# Public entry point
# ----------------------------------------------------------------------------

def qmatmul(A, pre_act_scaling_factor_A, B, pre_act_scaling_factor_B,
            *, op_dtype=jnp.bfloat16, tiles=None):
    """Pallas TPU implementation of QMatMul.forward.

    A: (..., M, K), B: (..., K, N) with identical leading batch dims.
    pre_act_scaling_factor_{A,B}: per-tensor (size-1) scaling factors.
    Returns (out (..., M, N), act_scaling_factor).
    """
    sA = jnp.asarray(pre_act_scaling_factor_A, jnp.float32)
    sB = jnp.asarray(pre_act_scaling_factor_B, jnp.float32)
    assert sA.size == 1 and sB.size == 1, "QMatMul uses per-tensor (scalar) scales"
    act_scaling_factor = sA * sB                       # module buffer / 2nd output
    sA_s = sA.reshape(())
    sB_s = sB.reshape(())
    scale = act_scaling_factor.reshape(1)              # SMEM scalar for the epilogue

    *batch_a, M, K = A.shape
    *batch_b, K2, N = B.shape
    assert K == K2 and tuple(batch_a) == tuple(batch_b), "shape mismatch"
    batch_dims = tuple(batch_a)
    G = math.prod(batch_dims) if batch_dims else 1
    out_dtype = jnp.promote_types(jnp.promote_types(A.dtype, B.dtype), jnp.float32)

    op_itemsize = jnp.dtype(op_dtype).itemsize
    out_itemsize = jnp.dtype(out_dtype).itemsize

    if tiles is None:
        Gb, tm, tk, tn = _choose_tiles(G, M, K, N, op_itemsize, out_itemsize)
    else:
        Gb, tm, tk, tn = tiles

    Gp = _round_up(G, Gb)
    Mp = _round_up(M, tm)
    Kp = _round_up(K, tk)
    Np = _round_up(N, tn)

    # De-scale to the (integer-valued) quantized domain and cast straight to
    # the MXU operand dtype: one fused XLA pass per operand, no fp32 round
    # trip; pad only when a dim does not divide its tile.
    a = _pad_to((A.reshape(G, M, K) / sA_s).astype(op_dtype), (Gp, Mp, Kp))
    b = _pad_to((B.reshape(G, K, N) / sB_s).astype(op_dtype), (Gp, Kp, Np))

    scale_spec = pl.BlockSpec(memory_space=pltpu.MemorySpace.SMEM)
    budget = _vmem_budget_bytes()

    if Gb > 1:
        # ---- batched small-head path: whole per-group matmul per step ----
        assert (tm, tk, tn) == (M, K, N), "Gb>1 requires full-dim per-group tiles"
        grid = (Gp // Gb,)
        need = 2 * Gb * ((Mp * Kp + Kp * Np) * op_itemsize + Mp * Np * out_itemsize)
        vmem_limit = int(min(max(2 * need, 32 << 20), budget))
        out = pl.pallas_call(
            _batched_kernel,
            out_shape=jax.ShapeDtypeStruct((Gp, Mp, Np), out_dtype),
            grid=grid,
            in_specs=[
                scale_spec,
                pl.BlockSpec((Gb, Mp, Kp), lambda g: (g, 0, 0)),
                pl.BlockSpec((Gb, Kp, Np), lambda g: (g, 0, 0)),
            ],
            out_specs=pl.BlockSpec((Gb, Mp, Np), lambda g: (g, 0, 0)),
            compiler_params=pltpu.CompilerParams(
                dimension_semantics=("parallel",),
                vmem_limit_bytes=vmem_limit),
        )(scale, a, b)
    else:
        # ---- tiled large-matmul path: K-innermost reduction, 2-D MXU dot ----
        grid = (Gp, Mp // tm, Np // tn, Kp // tk)
        direct_f32 = (out_dtype == jnp.float32)
        a_t = tm * tk * op_itemsize
        b_t = tk * tn * op_itemsize
        o_t = tm * tn * out_itemsize
        acc_t = 0 if direct_f32 else tm * tn * 4
        need = 2 * (a_t + b_t + o_t) + acc_t
        vmem_limit = int(min(max(2 * need, 32 << 20), budget))

        in_specs = [
            scale_spec,
            pl.BlockSpec((pl.Squeezed(), tm, tk), lambda g, i, j, k: (g, i, k)),
            pl.BlockSpec((pl.Squeezed(), tk, tn), lambda g, i, j, k: (g, k, j)),
        ]
        out_spec = pl.BlockSpec((pl.Squeezed(), tm, tn),
                                lambda g, i, j, k: (g, i, j))
        cparams = pltpu.CompilerParams(
            dimension_semantics=("parallel", "parallel", "parallel", "arbitrary"),
            vmem_limit_bytes=vmem_limit)

        if direct_f32:
            out = pl.pallas_call(
                _tiled_kernel_f32_out,
                out_shape=jax.ShapeDtypeStruct((Gp, Mp, Np), out_dtype),
                grid=grid, in_specs=in_specs, out_specs=out_spec,
                compiler_params=cparams,
            )(scale, a, b)
        else:
            out = pl.pallas_call(
                _tiled_kernel,
                out_shape=jax.ShapeDtypeStruct((Gp, Mp, Np), out_dtype),
                grid=grid, in_specs=in_specs, out_specs=out_spec,
                scratch_shapes=[pltpu.VMEM((tm, tn), jnp.float32)],
                compiler_params=cparams,
            )(scale, a, b)

    if (Gp, Mp, Np) != (G, M, N):
        out = out[:G, :M, :N]
    out = out.reshape(*batch_dims, M, N)
    # self.act_scaling_factor buffer update in the torch module is wrapper glue.
    return out, act_scaling_factor


if __name__ == "__main__":
    key = jax.random.PRNGKey(0)
    k_a, k_b, k_a2, k_b2 = jax.random.split(key, 4)
    hi = jax.lax.Precision.HIGHEST

    sA = jnp.array([0.02], dtype=jnp.float32)
    sB = jnp.array([0.03], dtype=jnp.float32)

    # 1) Attention-style small-head shape (group-batched path).  Inputs are
    #    fake-quantized (A/sA integer-valued), matching the module's contract,
    #    so the bf16 integer path is exact.
    batch, heads, M, K, N = 2, 4, 8, 32, 8
    A_int = jax.random.randint(k_a, (batch, heads, M, K), -127, 128).astype(jnp.float32)
    B_int = jax.random.randint(k_b, (batch, heads, K, N), -127, 128).astype(jnp.float32)
    A = A_int * sA
    B = B_int * sB

    out, act_sf = qmatmul(A, sA, B, sB)
    out = jax.block_until_ready(out)
    act_sf = jax.block_until_ready(act_sf)

    ref_out = jnp.einsum("bhmk,bhkn->bhmn", A / sA, B / sB, precision=hi) * (sA * sB)
    ref_sf = sA * sB
    assert out.shape == (batch, heads, M, N)
    assert jnp.allclose(out, ref_out, rtol=1e-4, atol=1e-3), "matmul mismatch (small)"
    assert jnp.allclose(act_sf, ref_sf), "scaling factor mismatch"

    # 2) Tiled / K-accumulating path (Gb==1, M/N/K tiling) exercised at small
    #    size via a tile override: grid = (2, 2, 2, 2).
    b2, h2, M2, K2, N2 = 1, 2, 32, 256, 256
    A2i = jax.random.randint(k_a2, (b2, h2, M2, K2), -127, 128).astype(jnp.float32)
    B2i = jax.random.randint(k_b2, (b2, h2, K2, N2), -127, 128).astype(jnp.float32)
    A2 = A2i * sA
    B2 = B2i * sB
    out2, _ = qmatmul(A2, sA, B2, sB, tiles=(1, 16, 128, 128))
    out2 = jax.block_until_ready(out2)
    ref2 = jnp.einsum("bhmk,bhkn->bhmn", A2 / sA, B2 / sB, precision=hi) * (sA * sB)
    assert jnp.allclose(out2, ref2, rtol=1e-4, atol=1e-2), "matmul mismatch (tiled)"

    # 3) fp32 operand opt-out (literal module arithmetic, no bf16 cast).
    out3, _ = qmatmul(A, sA, B, sB, op_dtype=jnp.float32)
    out3 = jax.block_until_ready(out3)
    assert jnp.allclose(out3, ref_out, rtol=1e-5, atol=1e-3), "fp32 path mismatch"

    print("KERNEL_OK")
</pallas_src>

<mosaic_0001>
module attributes {stable_mosaic.version = 11 : i64} {
  func.func @_batched_kernel(%arg0: i32, %arg1: memref<1xf32, #tpu.memory_space<smem>>, %arg2: memref<8x8x32xbf16, #tpu.memory_space<vmem>>, %arg3: memref<8x32x8xbf16, #tpu.memory_space<vmem>>, %arg4: memref<8x8x8xf32, #tpu.memory_space<vmem>>) attributes {dimension_semantics = [#tpu.dimension_semantics<parallel>], iteration_bounds = array<i64: 1>, scalar_prefetch = 0 : i64, scratch_operands = 0 : i64, tpu.core_type = #tpu.core_type<tc>, window_params = [{transform_indices = @transform_0, window_bounds = array<i64: 1>}, {transform_indices = @transform_1, window_bounds = array<i64: 8, 8, 32>}, {transform_indices = @transform_2, window_bounds = array<i64: 8, 32, 8>}, {transform_indices = @transform_3, window_bounds = array<i64: 8, 8, 8>}]} {
    %c0 = arith.constant 0 : index
    %c0_0 = arith.constant 0 : index
    %c0_1 = arith.constant 0 : index
    %0 = vector.load %arg2[%c0, %c0_0, %c0_1] : memref<8x8x32xbf16, #tpu.memory_space<vmem>>, vector<8x8x32xbf16>
    %c0_2 = arith.constant 0 : index
    %c0_3 = arith.constant 0 : index
    %c0_4 = arith.constant 0 : index
    %1 = vector.load %arg3[%c0_2, %c0_3, %c0_4] : memref<8x32x8xbf16, #tpu.memory_space<vmem>>, vector<8x32x8xbf16>
    "tpu.trace_start"() <{level = 10 : i32, message = "gmk,gkn->gmn"}> : () -> ()
    %cst = arith.constant dense<0.000000e+00> : vector<8x8x8xf32>
    %2 = tpu.matmul %0, %1, %cst {dimension_numbers = #tpu.dot_dimension_numbers<[2], [1], [1], [2], [0, 0, 0, 1, 1, 2], [0], [0]>} : vector<8x8x32xbf16>, vector<8x32x8xbf16>, vector<8x8x8xf32> -> vector<8x8x8xf32>
    "tpu.trace_stop"() : () -> ()
    %c0_5 = arith.constant 0 : index
    %3 = memref.load %arg1[%c0_5] : memref<1xf32, #tpu.memory_space<smem>>
    %4 = vector.broadcast %3 : f32 to vector<8x8x8xf32>
    %5 = arith.mulf %2, %4 : vector<8x8x8xf32>
    %c0_6 = arith.constant 0 : index
    %c0_7 = arith.constant 0 : index
    %c0_8 = arith.constant 0 : index
    %6 = vector.load %arg4[%c0_6, %c0_7, %c0_8] : memref<8x8x8xf32, #tpu.memory_space<vmem>>, vector<8x8x8xf32>
    tpu.vector_store %arg4[%c0_6, %c0_7, %c0_8], %5 {strides = array<i32>} : memref<8x8x8xf32, #tpu.memory_space<vmem>>, vector<8x8x8xf32>,
    return
  }
  func.func @transform_0(%arg0: i32) -> i32 {
    %c0_i32 = arith.constant 0 : i32
    %c0_i32_0 = arith.constant 0 : i32
    return %c0_i32 : i32
  }
  func.func @transform_1(%arg0: i32) -> (i32, i32, i32) {
    %c0_i32 = arith.constant 0 : i32
    %c0_i32_0 = arith.constant 0 : i32
    %c0_i32_1 = arith.constant 0 : i32
    return %arg0, %c0_i32, %c0_i32_0 : i32, i32, i32
  }
  func.func @transform_2(%arg0: i32) -> (i32, i32, i32) {
    %c0_i32 = arith.constant 0 : i32
    %c0_i32_0 = arith.constant 0 : i32
    %c0_i32_1 = arith.constant 0 : i32
    return %arg0, %c0_i32, %c0_i32_0 : i32, i32, i32
  }
  func.func @transform_3(%arg0: i32) -> (i32, i32, i32) {
    %c0_i32 = arith.constant 0 : i32
    %c0_i32_0 = arith.constant 0 : i32
    %c0_i32_1 = arith.constant 0 : i32
    return %arg0, %c0_i32, %c0_i32_0 : i32, i32, i32
  }
}

</mosaic_0001>

<llo_original>
// kernel: tpu_custom_call.1
$region0: #{tpu_custom_call.1}
  #allocation0 [shape = 'u32[]', space=smem, size = 0x4, offset = 0x4, fixed_abs, tag = 'smem constant byte address 0x4 - core index']
  #allocation1 [shape = 'u32[72,128]{1,0:T(1,128)}', space=vmem, size = 0x9000, scoped, tag = 'internal scratch']
  #allocation2 [shape = 'f32[1]{0:T(128)S(6)}', space=smem, size = 0x200, scoped, tag = 'scoped memory for tpu_custom_call.1']
  %s0 = inlined_call_operand.<no memory space> [shape: f32[1], index: 0, kind: input, shape index: {}]
  %s1 = inlined_call_operand.vmem [shape: bf16[8,8,32], index: 1, kind: input, shape index: {}]
  %s2 = inlined_call_operand.vmem [shape: bf16[8,32,8], index: 2, kind: input, shape index: {}]
  %s3 = inlined_call_operand.hbm [shape: f32[8,8,8], index: 3, kind: output, shape index: {}]
  %s4 = sld [smem:[#allocation0]]
  $region22: #{tpu_custom_call.1} parent=0
    _
  %s6 = ssub.s32 1, %s4
  %s7 = scalar_select 0, %s6, %s4
  %8 = sst [smem:[#allocation2]] %s0
  $region1: #{tpu_custom_call.1} parent=0
    #allocation3 [shape = 'u8[32768]{0}', space=vmem, size = 0x8000, scoped, tag = 'output window, operand 0, single buffered']
    #allocation4 [shape = 's32[1]{0}', space=sflag, size = 0x4, scoped, tag = 'scoped memory for tpu_custom_call.1']
    %9 = vsyncpa [#allocation4], 0
    // Predicated region
    $region2: #{tpu_custom_call.1} parent=1 // pred_check
      _
    $region3: #{tpu_custom_call.1} parent=1 // pred_check_branch
      %11 = sbr.rel (0) target = $region5
    $region4: #{tpu_custom_call.1} parent=1 // pred_region
      _
    $region5: #{tpu_custom_call.1} parent=1 // pred_fallthru
      _
    // Predicated region
    $region6: #{tpu_custom_call.1} parent=1 // pred_check
      _
    $region7: #{tpu_custom_call.1} parent=1 // pred_check_branch
      %13 = sbr.rel (0) target = $region9
    $region8: #{tpu_custom_call.1} parent=1 // pred_region
      _
    $region9: #{tpu_custom_call.1} parent=1 // pred_fallthru
      _
    // Predicated region
    $region10: #{tpu_custom_call.1} parent=1 // pred_check
      _
    $region11: #{tpu_custom_call.1} parent=1 // pred_check_branch
      %15 = sbr.rel (0) target = $region13
    $region12: #{tpu_custom_call.1} parent=1 // pred_region
      _
    $region13: #{tpu_custom_call.1} parent=1 // pred_fallthru
      _
    %v17 = vld [vmem:[%s1] sm:$0xf]
    %v18 = vld [vmem:[%s1 + $0x4] sm:$0xf]
    %v19 = vld [vmem:[%s1 + $0x8] sm:$0xf]
    %v20 = vld [vmem:[%s1 + $0xc] sm:$0xf]
    %v21 = vld [vmem:[%s1 + $0x10] sm:$0xf]
    %v22 = vld [vmem:[%s1 + $0x14] sm:$0xf]
    %v23 = vld [vmem:[%s1 + $0x18] sm:$0xf]
    %v24 = vld [vmem:[%s1 + $0x1c] sm:$0xf]
    %v25 = vld [vmem:[%s2] sm:$0xf]
    %v26 = vld [vmem:[%s2 + $0x4] sm:$0xf]
    %v27 = vld [vmem:[%s2 + $0x8] sm:$0xf]
    %v28 = vld [vmem:[%s2 + $0xc] sm:$0xf]
    %v29 = vld [vmem:[%s2 + $0x10] sm:$0xf]
    %v30 = vld [vmem:[%s2 + $0x14] sm:$0xf]
    %v31 = vld [vmem:[%s2 + $0x18] sm:$0xf]
    %v32 = vld [vmem:[%s2 + $0x1c] sm:$0xf]
    %v33 = vld [vmem:[%s2 + $0x20] sm:$0xf]
    %v34 = vld [vmem:[%s2 + $0x24] sm:$0xf]
    %v35 = vld [vmem:[%s2 + $0x28] sm:$0xf]
    %v36 = vld [vmem:[%s2 + $0x2c] sm:$0xf]
    %v37 = vld [vmem:[%s2 + $0x30] sm:$0xf]
    %v38 = vld [vmem:[%s2 + $0x34] sm:$0xf]
    %v39 = vld [vmem:[%s2 + $0x38] sm:$0xf]
    %v40 = vld [vmem:[%s2 + $0x3c] sm:$0xf]
    %v41 = vld [vmem:[%s2 + $0x40] sm:$0xf]
    %v42 = vld [vmem:[%s2 + $0x44] sm:$0xf]
    %v43 = vld [vmem:[%s2 + $0x48] sm:$0xf]
    %v44 = vld [vmem:[%s2 + $0x4c] sm:$0xf]
    %v45 = vld [vmem:[%s2 + $0x50] sm:$0xf]
    %v46 = vld [vmem:[%s2 + $0x54] sm:$0xf]
    %v47 = vld [vmem:[%s2 + $0x58] sm:$0xf]
    %v48 = vld [vmem:[%s2 + $0x5c] sm:$0xf]
    %v49 = vld [vmem:[%s2 + $0x60] sm:$0xf]
    %v50 = vld [vmem:[%s2 + $0x64] sm:$0xf]
    %v51 = vld [vmem:[%s2 + $0x68] sm:$0xf]
    %v52 = vld [vmem:[%s2 + $0x6c] sm:$0xf]
    %v53 = vld [vmem:[%s2 + $0x70] sm:$0xf]
    %v54 = vld [vmem:[%s2 + $0x74] sm:$0xf]
    %v55 = vld [vmem:[%s2 + $0x78] sm:$0xf]
    %v56 = vld [vmem:[%s2 + $0x7c] sm:$0xf]
    %v61 = vunpack.c.l.b16 %v25
    %v62 = vunpack.c.l.b16 %v26
    %v63 = vunpack.c.l.b16 %v27
    %v64 = vunpack.c.l.b16 %v28
    %v65 = vpack.c.b16 %v62, %v61
    %v66 = vpack.c.b16 %v64, %v63
    %vm69 = vcmask 261120
    %v71 = vsel %vm69, %v17, 0
    %73 = vmatpush.bf16.msra.mxu0 0
    %74 = vmatpush.bf16.msra.mxu0 0
    %75 = vmatpush.bf16.msra.mxu0 0
    %76 = vmatpush.bf16.msra.mxu0 0
    %77 = vmatpush.bf16.msra.mxu0 0
    %78 = vmatpush.bf16.msra.mxu0 0
    %79 = vmatpush.bf16.msra.mxu0 %v66
    %80 = vmatpush.bf16.msra.mxu0 %v65
    %81 = vmatmul.bf16.gmra.mxu0 %v71
    %v82 = vpop.f32.mrf.mxu0
    %v83 = vadd.f32 0.0, %v82
    %v84 = vpop.f32.mrf.mxu0
    %85 = vdwg.mxu0
    %v90 = vunpack.c.l.b16 %v29
    %v91 = vunpack.c.l.b16 %v30
    %v92 = vunpack.c.l.b16 %v31
    %v93 = vunpack.c.l.b16 %v32
    %v94 = vpack.c.b16 %v91, %v90
    %v95 = vpack.c.b16 %v93, %v92
    %v99 = vsel %vm69, %v18, 0
    %101 = vmatpush.bf16.msra.mxu0 0
    %102 = vmatpush.bf16.msra.mxu0 0
    %103 = vmatpush.bf16.msra.mxu0 0
    %104 = vmatpush.bf16.msra.mxu0 0
    %105 = vmatpush.bf16.msra.mxu0 0
    %106 = vmatpush.bf16.msra.mxu0 0
    %107 = vmatpush.bf16.msra.mxu0 %v95
    %108 = vmatpush.bf16.msra.mxu0 %v94
    %109 = vmatmul.bf16.gmra.mxu0 %v99
    %v110 = vpop.f32.mrf.mxu0
    %v111 = vadd.f32 0.0, %v110
    %v112 = vpop.f32.mrf.mxu0
    %113 = vdwg.mxu0
    %v118 = vunpack.c.l.b16 %v33
    %v119 = vunpack.c.l.b16 %v34
    %v120 = vunpack.c.l.b16 %v35
    %v121 = vunpack.c.l.b16 %v36
    %v122 = vpack.c.b16 %v119, %v118
    %v123 = vpack.c.b16 %v121, %v120
    %v127 = vsel %vm69, %v19, 0
    %129 = vmatpush.bf16.msra.mxu0 0
    %130 = vmatpush.bf16.msra.mxu0 0
    %131 = vmatpush.bf16.msra.mxu0 0
    %132 = vmatpush.bf16.msra.mxu0 0
    %133 = vmatpush.bf16.msra.mxu0 0
    %134 = vmatpush.bf16.msra.mxu0 0
    %135 = vmatpush.bf16.msra.mxu0 %v123
    %136 = vmatpush.bf16.msra.mxu0 %v122
    %137 = vmatmul.bf16.gmra.mxu0 %v127
    %v138 = vpop.f32.mrf.mxu0
    %v139 = vadd.f32 0.0, %v138
    %v140 = vpop.f32.mrf.mxu0
    %141 = vdwg.mxu0
    %v146 = vunpack.c.l.b16 %v37
    %v147 = vunpack.c.l.b16 %v38
    %v148 = vunpack.c.l.b16 %v39
    %v149 = vunpack.c.l.b16 %v40
    %v150 = vpack.c.b16 %v147, %v146
    %v151 = vpack.c.b16 %v149, %v148
    %v155 = vsel %vm69, %v20, 0
    %157 = vmatpush.bf16.msra.mxu0 0
    %158 = vmatpush.bf16.msra.mxu0 0
    %159 = vmatpush.bf16.msra.mxu0 0
    %160 = vmatpush.bf16.msra.mxu0 0
    %161 = vmatpush.bf16.msra.mxu0 0
    %162 = vmatpush.bf16.msra.mxu0 0
    %163 = vmatpush.bf16.msra.mxu0 %v151
    %164 = vmatpush.bf16.msra.mxu0 %v150
    %165 = vmatmul.bf16.gmra.mxu0 %v155
    %v166 = vpop.f32.mrf.mxu0
    %v167 = vadd.f32 0.0, %v166
    %v168 = vpop.f32.mrf.mxu0
    %169 = vdwg.mxu0
    %v174 = vunpack.c.l.b16 %v41
    %v175 = vunpack.c.l.b16 %v42
    %v176 = vunpack.c.l.b16 %v43
    %v177 = vunpack.c.l.b16 %v44
    %v178 = vpack.c.b16 %v175, %v174
    %v179 = vpack.c.b16 %v177, %v176
    %v183 = vsel %vm69, %v21, 0
    %185 = vmatpush.bf16.msra.mxu0 0
    %186 = vmatpush.bf16.msra.mxu0 0
    %187 = vmatpush.bf16.msra.mxu0 0
    %188 = vmatpush.bf16.msra.mxu0 0
    %189 = vmatpush.bf16.msra.mxu0 0
    %190 = vmatpush.bf16.msra.mxu0 0
    %191 = vmatpush.bf16.msra.mxu0 %v179
    %192 = vmatpush.bf16.msra.mxu0 %v178
    %193 = vmatmul.bf16.gmra.mxu0 %v183
    %v194 = vpop.f32.mrf.mxu0
    %v195 = vadd.f32 0.0, %v194
    %v196 = vpop.f32.mrf.mxu0
    %197 = vdwg.mxu0
    %v202 = vunpack.c.l.b16 %v45
    %v203 = vunpack.c.l.b16 %v46
    %v204 = vunpack.c.l.b16 %v47
    %v205 = vunpack.c.l.b16 %v48
    %v206 = vpack.c.b16 %v203, %v202
    %v207 = vpack.c.b16 %v205, %v204
    %v211 = vsel %vm69, %v22, 0
    %213 = vmatpush.bf16.msra.mxu0 0
    %214 = vmatpush.bf16.msra.mxu0 0
    %215 = vmatpush.bf16.msra.mxu0 0
    %216 = vmatpush.bf16.msra.mxu0 0
    %217 = vmatpush.bf16.msra.mxu0 0
    %218 = vmatpush.bf16.msra.mxu0 0
    %219 = vmatpush.bf16.msra.mxu0 %v207
    %220 = vmatpush.bf16.msra.mxu0 %v206
    %221 = vmatmul.bf16.gmra.mxu0 %v211
    %v222 = vpop.f32.mrf.mxu0
    %v223 = vadd.f32 0.0, %v222
    %v224 = vpop.f32.mrf.mxu0
    %225 = vdwg.mxu0
    %v230 = vunpack.c.l.b16 %v49
    %v231 = vunpack.c.l.b16 %v50
    %v232 = vunpack.c.l.b16 %v51
    %v233 = vunpack.c.l.b16 %v52
    %v234 = vpack.c.b16 %v231, %v230
    %v235 = vpack.c.b16 %v233, %v232
    %v239 = vsel %vm69, %v23, 0
    %241 = vmatpush.bf16.msra.mxu0 0
    %242 = vmatpush.bf16.msra.mxu0 0
    %243 = vmatpush.bf16.msra.mxu0 0
    %244 = vmatpush.bf16.msra.mxu0 0
    %245 = vmatpush.bf16.msra.mxu0 0
    %246 = vmatpush.bf16.msra.mxu0 0
    %247 = vmatpush.bf16.msra.mxu0 %v235
    %248 = vmatpush.bf16.msra.mxu0 %v234
    %249 = vmatmul.bf16.gmra.mxu0 %v239
    %v250 = vpop.f32.mrf.mxu0
    %v251 = vadd.f32 0.0, %v250
    %v252 = vpop.f32.mrf.mxu0
    %253 = vdwg.mxu0
    %v258 = vunpack.c.l.b16 %v53
    %v259 = vunpack.c.l.b16 %v54
    %v260 = vunpack.c.l.b16 %v55
    %v261 = vunpack.c.l.b16 %v56
    %v262 = vpack.c.b16 %v259, %v258
    %v263 = vpack.c.b16 %v261, %v260
    %v267 = vsel %vm69, %v24, 0
    %269 = vmatpush.bf16.msra.mxu0 0
    %270 = vmatpush.bf16.msra.mxu0 0
    %271 = vmatpush.bf16.msra.mxu0 0
    %272 = vmatpush.bf16.msra.mxu0 0
    %273 = vmatpush.bf16.msra.mxu0 0
    %274 = vmatpush.bf16.msra.mxu0 0
    %275 = vmatpush.bf16.msra.mxu0 %v263
    %276 = vmatpush.bf16.msra.mxu0 %v262
    %277 = vmatmul.bf16.gmra.mxu0 %v267
    %v278 = vpop.f32.mrf.mxu0
    %v279 = vadd.f32 0.0, %v278
    %v280 = vpop.f32.mrf.mxu0
    %281 = vdwg.mxu0
    %s282 = sld [smem:[#allocation2]]
    %v283 = vstv %s282
    %v284 = vmul.f32 %v83, %v283
    %v285 = vmul.f32 %v111, %v283
    %v286 = vmul.f32 %v139, %v283
    %v287 = vmul.f32 %v167, %v283
    %v288 = vmul.f32 %v195, %v283
    %v289 = vmul.f32 %v223, %v283
    %v290 = vmul.f32 %v251, %v283
    %v291 = vmul.f32 %v279, %v283
    %vm292 = vcmask 64512
    %293 = vst.msk [vmem:[#allocation3] sm:$0xff] %vm292, %v284
    %294 = vst.msk [vmem:[#allocation3 + $0x8] sm:$0xff] %vm292, %v285
    %295 = vst.msk [vmem:[#allocation3 + $0x10] sm:$0xff] %vm292, %v286
    %296 = vst.msk [vmem:[#allocation3 + $0x18] sm:$0xff] %vm292, %v287
    %297 = vst.msk [vmem:[#allocation3 + $0x20] sm:$0xff] %vm292, %v288
    %298 = vst.msk [vmem:[#allocation3 + $0x28] sm:$0xff] %vm292, %v289
    %299 = vst.msk [vmem:[#allocation3 + $0x30] sm:$0xff] %vm292, %v290
    %300 = vst.msk [vmem:[#allocation3 + $0x38] sm:$0xff] %vm292, %v291
    // Predicated region
    $region14: #{tpu_custom_call.1} parent=1 // pred_check
      _
    $region15: #{tpu_custom_call.1} parent=1 // pred_check_branch
      %302 = sbr.rel (0) target = $region17
    $region16: #{tpu_custom_call.1} parent=1 // pred_region
      %304 = vsyncadd [#allocation4], 0
      %s305 = sshll.u32 [#allocation3], 4
      %s306 = int_to_ptr.vmem [resolvable:$true] %s305
      %s307 = sshll.u32 %s3, 4
      %s308 = int_to_ptr.hbm [resolvable:$true] %s307
      %313 = dma.vmem_to_hbm [thread:$0]  %s306, 1024, %s308, [#allocation4], 128, 128, 8
    $region17: #{tpu_custom_call.1} parent=1 // pred_fallthru
      _
    // Predicated region
    $region18: #{tpu_custom_call.1} parent=1 // pred_check
      _
    $region19: #{tpu_custom_call.1} parent=1 // pred_check_branch
      %315 = sbr.rel (0) target = $region21
    $region20: #{tpu_custom_call.1} parent=1 // pred_region
      %317 = dma.done [#allocation4], 1024
    $region21: #{tpu_custom_call.1} parent=1 // pred_fallthru
      _
    %318 = vsyncpa [#allocation4], 1

</llo_original>
